<compile_context>
chip_gen: v7x
topology: tpu7x:2x2x1
jax: 0.10.0
libtpu: 0.0.40
codegen_flags: <defaults>
</compile_context>

<pallas_src>
import numpy as np
import jax
import jax.numpy as jnp
from jax import lax
from jax.experimental import pallas as pl
from jax.experimental.pallas import tpu as pltpu

K = 5                 # polynomial order / conv kernel width
NUM_HIDDEN_LAYER = 10
ACTIVATION = 1        # sigmoid branch: x = 2 * sigmoid(conv(x))


def _fused_kernel(w_ref, b_ref, x_ref, u_ref, out_ref, d_ref):
    """Polynomial chain + scaled Gram matmul for one block of batches.

    w_ref  : SMEM (K,)        conv weights; w[k] multiplies x**(k+1)
    b_ref  : SMEM (1,)        conv bias
    x_ref  : VMEM (bb, 1, N)  input scalars
    u_ref  : VMEM (bb, M, N)  eigenvector-like factors
    out_ref: VMEM (bb, M, M)  u @ diag(d) @ u^T
    d_ref  : VMEM (bb, 1, N)  final per-node scalars (diagonal entries)
    """
    v = x_ref[...]                                   # (bb, 1, N) f32
    # Hoist SMEM scalar reads out of the (unrolled) layer loop.
    wk = [w_ref[i] for i in range(K)]
    bias = b_ref[0]
    for _ in range(NUM_HIDDEN_LAYER):
        # Horner: sum_k w[k]*v**(k+1) + b == v*(w0 + v*(w1 + ... + v*w[K-1])) + b
        acc = wk[K - 1]
        for i in range(K - 2, -1, -1):
            acc = acc * v + wk[i]
        acc = acc * v + bias
        v = 2.0 * jax.nn.sigmoid(acc)                # activation == 1
    d_ref[...] = v

    u = u_ref[...]                                   # (bb, M, N)
    ud = u * v                                       # scale columns by diag entries
    # Contract last dims of both operands directly on the MXU — avoids an
    # explicit (M, N) transpose (XLU work / VMEM copy).
    # TODO(synk): for v6e/v7x a bf16 cast of ud/u (f32 accumulation) would give
    # ~4x MXU throughput but loosens numerics vs the f32 reference tolerance.
    out_ref[...] = lax.dot_general(
        ud, u,
        dimension_numbers=(((2,), (2,)), ((0,), (0,))),
        preferred_element_type=jnp.float32)


def _pick_batch_block(B, M, N):
    """Batches per grid step: fit 2x double-buffered tiles in a conservative
    VMEM budget (safe for v5e's 16 MiB / v7x's 32 MiB scoped defaults), while
    keeping at least 2 grid steps for v7x's two TensorCores."""
    per_batch_bytes = 4 * (M * N + M * M + 2 * N)    # u, out, x, d
    budget = 8 * 1024 * 1024
    bb = max(1, budget // (2 * per_batch_bytes))
    if B >= 2:
        bb = min(bb, B // 2)
    bb = min(max(bb, 1), B)
    while B % bb != 0:                               # keep the grid exact
        bb -= 1
    return bb


def spectral_net_forward(x_nchw, u, w, b, *, materialize_diag=True):
    """x_nchw: (B, 1, N, 1) f32, u: (B, M, N) f32, w: (K,) f32, b: (1,) f32."""
    B, C, N, W1 = x_nchw.shape
    assert C == 1 and W1 == 1
    _, M, Nu = u.shape
    assert Nu == N

    x3 = x_nchw.reshape(B, 1, N).astype(jnp.float32)
    u = u.astype(jnp.float32)
    w = w.astype(jnp.float32)
    b = b.astype(jnp.float32)

    bb = _pick_batch_block(B, M, N)
    out, d3 = pl.pallas_call(
        _fused_kernel,
        out_shape=(jax.ShapeDtypeStruct((B, M, M), jnp.float32),
                   jax.ShapeDtypeStruct((B, 1, N), jnp.float32)),
        grid=(B // bb,),
        in_specs=[
            pl.BlockSpec(memory_space=pltpu.MemorySpace.SMEM),    # w
            pl.BlockSpec(memory_space=pltpu.MemorySpace.SMEM),    # b
            pl.BlockSpec((bb, 1, N), lambda i: (i, 0, 0)),        # x
            pl.BlockSpec((bb, M, N), lambda i: (i, 0, 0)),        # u
        ],
        out_specs=[
            pl.BlockSpec((bb, M, M), lambda i: (i, 0, 0)),        # output
            pl.BlockSpec((bb, 1, N), lambda i: (i, 0, 0)),        # d
        ],
        compiler_params=pltpu.CompilerParams(
            dimension_semantics=("parallel",)),
    )(w, b, x3, u)

    d2d = d3.reshape(B, N)
    if not materialize_diag:
        # Perf path: avoid the dense B*N*N HBM write; build diag at use site.
        return out, d2d

    # Parity with the PyTorch forward: x = d expanded to (B,1,N,N) * eye(N).
    x_diag = d2d[:, None, :, None] * jnp.eye(N, dtype=jnp.float32)[None, None]
    return out, x_diag


def _reference(x_nchw, u, w, b):
    """Pure-JAX reference of the PyTorch forward (for verification)."""
    B, _, N, _ = x_nchw.shape
    v = x_nchw[:, 0, :, 0].astype(jnp.float32)            # (B, N)
    for _ in range(NUM_HIDDEN_LAYER):
        acc = jnp.full_like(v, b[0])
        for i in range(1, K + 1):
            acc = acc + w[i - 1] * (v ** i)
        v = 2.0 * jax.nn.sigmoid(acc)
    x_diag = v[:, None, :, None] * jnp.eye(N, dtype=jnp.float32)[None, None]
    xd = x_diag[:, 0]                                      # (B, N, N)
    out = jnp.matmul(jnp.matmul(u, xd), jnp.swapaxes(u, 1, 2))
    return out, x_diag


if __name__ == "__main__":
    key = jax.random.PRNGKey(0)
    k1, k2, k3, k4 = jax.random.split(key, 4)

    B, N, M = 2, 16, 8

    # "Conv" parameters: Conv2d weight (1,1,1,K) flattened to (K,), bias (1,)
    w = 0.2 * jax.random.normal(k1, (K,), dtype=jnp.float32)
    b = 0.1 * jax.random.normal(k2, (1,), dtype=jnp.float32)

    # Inputs consistent with the forward: x NCHW (B,1,N,1), u (B,M,N)
    x = jax.random.normal(k3, (B, 1, N, 1), dtype=jnp.float32)
    u = jax.random.normal(k4, (B, M, N), dtype=jnp.float32)

    out, x_diag = spectral_net_forward(x, u, w, b)
    out = jax.block_until_ready(out)
    x_diag = jax.block_until_ready(x_diag)

    out_ref, x_diag_ref = _reference(x, u, w, b)
    np.testing.assert_allclose(np.asarray(out), np.asarray(out_ref),
                               rtol=1e-5, atol=1e-5)
    np.testing.assert_allclose(np.asarray(x_diag), np.asarray(x_diag_ref),
                               rtol=1e-5, atol=1e-5)

    print("KERNEL_OK")
</pallas_src>

<mosaic_0001>
module attributes {stable_mosaic.version = 11 : i64} {
  func.func @_fused_kernel(%arg0: i32, %arg1: memref<5xf32, #tpu.memory_space<smem>>, %arg2: memref<1xf32, #tpu.memory_space<smem>>, %arg3: memref<1x1x16xf32, #tpu.memory_space<vmem>>, %arg4: memref<1x8x16xf32, #tpu.memory_space<vmem>>, %arg5: memref<1x8x8xf32, #tpu.memory_space<vmem>>, %arg6: memref<1x1x16xf32, #tpu.memory_space<vmem>>) attributes {dimension_semantics = [#tpu.dimension_semantics<parallel>], iteration_bounds = array<i64: 2>, scalar_prefetch = 0 : i64, scratch_operands = 0 : i64, tpu.core_type = #tpu.core_type<tc>, window_params = [{transform_indices = @transform_0, window_bounds = array<i64: 5>}, {transform_indices = @transform_1, window_bounds = array<i64: 1>}, {transform_indices = @transform_2, window_bounds = array<i64: 1, 1, 16>}, {transform_indices = @transform_3, window_bounds = array<i64: 1, 8, 16>}, {transform_indices = @transform_4, window_bounds = array<i64: 1, 8, 8>}, {transform_indices = @transform_5, window_bounds = array<i64: 1, 1, 16>}]} {
    %c0 = arith.constant 0 : index
    %c0_0 = arith.constant 0 : index
    %c0_1 = arith.constant 0 : index
    %0 = vector.load %arg3[%c0, %c0_0, %c0_1] : memref<1x1x16xf32, #tpu.memory_space<vmem>>, vector<1x1x16xf32>
    %c0_2 = arith.constant 0 : index
    %1 = memref.load %arg1[%c0_2] : memref<5xf32, #tpu.memory_space<smem>>
    %c1 = arith.constant 1 : index
    %2 = memref.load %arg1[%c1] : memref<5xf32, #tpu.memory_space<smem>>
    %c2 = arith.constant 2 : index
    %3 = memref.load %arg1[%c2] : memref<5xf32, #tpu.memory_space<smem>>
    %c3 = arith.constant 3 : index
    %4 = memref.load %arg1[%c3] : memref<5xf32, #tpu.memory_space<smem>>
    %c4 = arith.constant 4 : index
    %5 = memref.load %arg1[%c4] : memref<5xf32, #tpu.memory_space<smem>>
    %c0_3 = arith.constant 0 : index
    %6 = memref.load %arg2[%c0_3] : memref<1xf32, #tpu.memory_space<smem>>
    %7 = vector.broadcast %5 : f32 to vector<1x1x16xf32>
    %8 = arith.mulf %7, %0 : vector<1x1x16xf32>
    %9 = vector.broadcast %4 : f32 to vector<1x1x16xf32>
    %10 = arith.addf %8, %9 : vector<1x1x16xf32>
    %11 = arith.mulf %10, %0 : vector<1x1x16xf32>
    %12 = vector.broadcast %3 : f32 to vector<1x1x16xf32>
    %13 = arith.addf %11, %12 : vector<1x1x16xf32>
    %14 = arith.mulf %13, %0 : vector<1x1x16xf32>
    %15 = vector.broadcast %2 : f32 to vector<1x1x16xf32>
    %16 = arith.addf %14, %15 : vector<1x1x16xf32>
    %17 = arith.mulf %16, %0 : vector<1x1x16xf32>
    %18 = vector.broadcast %1 : f32 to vector<1x1x16xf32>
    %19 = arith.addf %17, %18 : vector<1x1x16xf32>
    %20 = arith.mulf %19, %0 : vector<1x1x16xf32>
    %21 = vector.broadcast %6 : f32 to vector<1x1x16xf32>
    %22 = arith.addf %20, %21 : vector<1x1x16xf32>
    %23 = arith.negf %22 : vector<1x1x16xf32>
    %24 = math.exp %23 : vector<1x1x16xf32>
    %cst = arith.constant 1.000000e+00 : f32
    %25 = vector.broadcast %cst : f32 to vector<1x1x16xf32>
    %26 = arith.addf %25, %24 : vector<1x1x16xf32>
    %27 = arith.divf %25, %26 : vector<1x1x16xf32>
    %cst_4 = arith.constant 2.000000e+00 : f32
    %28 = vector.broadcast %cst_4 : f32 to vector<1x1x16xf32>
    %29 = arith.mulf %28, %27 : vector<1x1x16xf32>
    %30 = vector.broadcast %5 : f32 to vector<1x1x16xf32>
    %31 = arith.mulf %30, %29 : vector<1x1x16xf32>
    %32 = vector.broadcast %4 : f32 to vector<1x1x16xf32>
    %33 = arith.addf %31, %32 : vector<1x1x16xf32>
    %34 = arith.mulf %33, %29 : vector<1x1x16xf32>
    %35 = vector.broadcast %3 : f32 to vector<1x1x16xf32>
    %36 = arith.addf %34, %35 : vector<1x1x16xf32>
    %37 = arith.mulf %36, %29 : vector<1x1x16xf32>
    %38 = vector.broadcast %2 : f32 to vector<1x1x16xf32>
    %39 = arith.addf %37, %38 : vector<1x1x16xf32>
    %40 = arith.mulf %39, %29 : vector<1x1x16xf32>
    %41 = vector.broadcast %1 : f32 to vector<1x1x16xf32>
    %42 = arith.addf %40, %41 : vector<1x1x16xf32>
    %43 = arith.mulf %42, %29 : vector<1x1x16xf32>
    %44 = vector.broadcast %6 : f32 to vector<1x1x16xf32>
    %45 = arith.addf %43, %44 : vector<1x1x16xf32>
    %46 = arith.negf %45 : vector<1x1x16xf32>
    %47 = math.exp %46 : vector<1x1x16xf32>
    %cst_5 = arith.constant 1.000000e+00 : f32
    %48 = vector.broadcast %cst_5 : f32 to vector<1x1x16xf32>
    %49 = arith.addf %48, %47 : vector<1x1x16xf32>
    %50 = arith.divf %48, %49 : vector<1x1x16xf32>
    %cst_6 = arith.constant 2.000000e+00 : f32
    %51 = vector.broadcast %cst_6 : f32 to vector<1x1x16xf32>
    %52 = arith.mulf %51, %50 : vector<1x1x16xf32>
    %53 = vector.broadcast %5 : f32 to vector<1x1x16xf32>
    %54 = arith.mulf %53, %52 : vector<1x1x16xf32>
    %55 = vector.broadcast %4 : f32 to vector<1x1x16xf32>
    %56 = arith.addf %54, %55 : vector<1x1x16xf32>
    %57 = arith.mulf %56, %52 : vector<1x1x16xf32>
    %58 = vector.broadcast %3 : f32 to vector<1x1x16xf32>
    %59 = arith.addf %57, %58 : vector<1x1x16xf32>
    %60 = arith.mulf %59, %52 : vector<1x1x16xf32>
    %61 = vector.broadcast %2 : f32 to vector<1x1x16xf32>
    %62 = arith.addf %60, %61 : vector<1x1x16xf32>
    %63 = arith.mulf %62, %52 : vector<1x1x16xf32>
    %64 = vector.broadcast %1 : f32 to vector<1x1x16xf32>
    %65 = arith.addf %63, %64 : vector<1x1x16xf32>
    %66 = arith.mulf %65, %52 : vector<1x1x16xf32>
    %67 = vector.broadcast %6 : f32 to vector<1x1x16xf32>
    %68 = arith.addf %66, %67 : vector<1x1x16xf32>
    %69 = arith.negf %68 : vector<1x1x16xf32>
    %70 = math.exp %69 : vector<1x1x16xf32>
    %cst_7 = arith.constant 1.000000e+00 : f32
    %71 = vector.broadcast %cst_7 : f32 to vector<1x1x16xf32>
    %72 = arith.addf %71, %70 : vector<1x1x16xf32>
    %73 = arith.divf %71, %72 : vector<1x1x16xf32>
    %cst_8 = arith.constant 2.000000e+00 : f32
    %74 = vector.broadcast %cst_8 : f32 to vector<1x1x16xf32>
    %75 = arith.mulf %74, %73 : vector<1x1x16xf32>
    %76 = vector.broadcast %5 : f32 to vector<1x1x16xf32>
    %77 = arith.mulf %76, %75 : vector<1x1x16xf32>
    %78 = vector.broadcast %4 : f32 to vector<1x1x16xf32>
    %79 = arith.addf %77, %78 : vector<1x1x16xf32>
    %80 = arith.mulf %79, %75 : vector<1x1x16xf32>
    %81 = vector.broadcast %3 : f32 to vector<1x1x16xf32>
    %82 = arith.addf %80, %81 : vector<1x1x16xf32>
    %83 = arith.mulf %82, %75 : vector<1x1x16xf32>
    %84 = vector.broadcast %2 : f32 to vector<1x1x16xf32>
    %85 = arith.addf %83, %84 : vector<1x1x16xf32>
    %86 = arith.mulf %85, %75 : vector<1x1x16xf32>
    %87 = vector.broadcast %1 : f32 to vector<1x1x16xf32>
    %88 = arith.addf %86, %87 : vector<1x1x16xf32>
    %89 = arith.mulf %88, %75 : vector<1x1x16xf32>
    %90 = vector.broadcast %6 : f32 to vector<1x1x16xf32>
    %91 = arith.addf %89, %90 : vector<1x1x16xf32>
    %92 = arith.negf %91 : vector<1x1x16xf32>
    %93 = math.exp %92 : vector<1x1x16xf32>
    %cst_9 = arith.constant 1.000000e+00 : f32
    %94 = vector.broadcast %cst_9 : f32 to vector<1x1x16xf32>
    %95 = arith.addf %94, %93 : vector<1x1x16xf32>
    %96 = arith.divf %94, %95 : vector<1x1x16xf32>
    %cst_10 = arith.constant 2.000000e+00 : f32
    %97 = vector.broadcast %cst_10 : f32 to vector<1x1x16xf32>
    %98 = arith.mulf %97, %96 : vector<1x1x16xf32>
    %99 = vector.broadcast %5 : f32 to vector<1x1x16xf32>
    %100 = arith.mulf %99, %98 : vector<1x1x16xf32>
    %101 = vector.broadcast %4 : f32 to vector<1x1x16xf32>
    %102 = arith.addf %100, %101 : vector<1x1x16xf32>
    %103 = arith.mulf %102, %98 : vector<1x1x16xf32>
    %104 = vector.broadcast %3 : f32 to vector<1x1x16xf32>
    %105 = arith.addf %103, %104 : vector<1x1x16xf32>
    %106 = arith.mulf %105, %98 : vector<1x1x16xf32>
    %107 = vector.broadcast %2 : f32 to vector<1x1x16xf32>
    %108 = arith.addf %106, %107 : vector<1x1x16xf32>
    %109 = arith.mulf %108, %98 : vector<1x1x16xf32>
    %110 = vector.broadcast %1 : f32 to vector<1x1x16xf32>
    %111 = arith.addf %109, %110 : vector<1x1x16xf32>
    %112 = arith.mulf %111, %98 : vector<1x1x16xf32>
    %113 = vector.broadcast %6 : f32 to vector<1x1x16xf32>
    %114 = arith.addf %112, %113 : vector<1x1x16xf32>
    %115 = arith.negf %114 : vector<1x1x16xf32>
    %116 = math.exp %115 : vector<1x1x16xf32>
    %cst_11 = arith.constant 1.000000e+00 : f32
    %117 = vector.broadcast %cst_11 : f32 to vector<1x1x16xf32>
    %118 = arith.addf %117, %116 : vector<1x1x16xf32>
    %119 = arith.divf %117, %118 : vector<1x1x16xf32>
    %cst_12 = arith.constant 2.000000e+00 : f32
    %120 = vector.broadcast %cst_12 : f32 to vector<1x1x16xf32>
    %121 = arith.mulf %120, %119 : vector<1x1x16xf32>
    %122 = vector.broadcast %5 : f32 to vector<1x1x16xf32>
    %123 = arith.mulf %122, %121 : vector<1x1x16xf32>
    %124 = vector.broadcast %4 : f32 to vector<1x1x16xf32>
    %125 = arith.addf %123, %124 : vector<1x1x16xf32>
    %126 = arith.mulf %125, %121 : vector<1x1x16xf32>
    %127 = vector.broadcast %3 : f32 to vector<1x1x16xf32>
    %128 = arith.addf %126, %127 : vector<1x1x16xf32>
    %129 = arith.mulf %128, %121 : vector<1x1x16xf32>
    %130 = vector.broadcast %2 : f32 to vector<1x1x16xf32>
    %131 = arith.addf %129, %130 : vector<1x1x16xf32>
    %132 = arith.mulf %131, %121 : vector<1x1x16xf32>
    %133 = vector.broadcast %1 : f32 to vector<1x1x16xf32>
    %134 = arith.addf %132, %133 : vector<1x1x16xf32>
    %135 = arith.mulf %134, %121 : vector<1x1x16xf32>
    %136 = vector.broadcast %6 : f32 to vector<1x1x16xf32>
    %137 = arith.addf %135, %136 : vector<1x1x16xf32>
    %138 = arith.negf %137 : vector<1x1x16xf32>
    %139 = math.exp %138 : vector<1x1x16xf32>
    %cst_13 = arith.constant 1.000000e+00 : f32
    %140 = vector.broadcast %cst_13 : f32 to vector<1x1x16xf32>
    %141 = arith.addf %140, %139 : vector<1x1x16xf32>
    %142 = arith.divf %140, %141 : vector<1x1x16xf32>
    %cst_14 = arith.constant 2.000000e+00 : f32
    %143 = vector.broadcast %cst_14 : f32 to vector<1x1x16xf32>
    %144 = arith.mulf %143, %142 : vector<1x1x16xf32>
    %145 = vector.broadcast %5 : f32 to vector<1x1x16xf32>
    %146 = arith.mulf %145, %144 : vector<1x1x16xf32>
    %147 = vector.broadcast %4 : f32 to vector<1x1x16xf32>
    %148 = arith.addf %146, %147 : vector<1x1x16xf32>
    %149 = arith.mulf %148, %144 : vector<1x1x16xf32>
    %150 = vector.broadcast %3 : f32 to vector<1x1x16xf32>
    %151 = arith.addf %149, %150 : vector<1x1x16xf32>
    %152 = arith.mulf %151, %144 : vector<1x1x16xf32>
    %153 = vector.broadcast %2 : f32 to vector<1x1x16xf32>
    %154 = arith.addf %152, %153 : vector<1x1x16xf32>
    %155 = arith.mulf %154, %144 : vector<1x1x16xf32>
    %156 = vector.broadcast %1 : f32 to vector<1x1x16xf32>
    %157 = arith.addf %155, %156 : vector<1x1x16xf32>
    %158 = arith.mulf %157, %144 : vector<1x1x16xf32>
    %159 = vector.broadcast %6 : f32 to vector<1x1x16xf32>
    %160 = arith.addf %158, %159 : vector<1x1x16xf32>
    %161 = arith.negf %160 : vector<1x1x16xf32>
    %162 = math.exp %161 : vector<1x1x16xf32>
    %cst_15 = arith.constant 1.000000e+00 : f32
    %163 = vector.broadcast %cst_15 : f32 to vector<1x1x16xf32>
    %164 = arith.addf %163, %162 : vector<1x1x16xf32>
    %165 = arith.divf %163, %164 : vector<1x1x16xf32>
    %cst_16 = arith.constant 2.000000e+00 : f32
    %166 = vector.broadcast %cst_16 : f32 to vector<1x1x16xf32>
    %167 = arith.mulf %166, %165 : vector<1x1x16xf32>
    %168 = vector.broadcast %5 : f32 to vector<1x1x16xf32>
    %169 = arith.mulf %168, %167 : vector<1x1x16xf32>
    %170 = vector.broadcast %4 : f32 to vector<1x1x16xf32>
    %171 = arith.addf %169, %170 : vector<1x1x16xf32>
    %172 = arith.mulf %171, %167 : vector<1x1x16xf32>
    %173 = vector.broadcast %3 : f32 to vector<1x1x16xf32>
    %174 = arith.addf %172, %173 : vector<1x1x16xf32>
    %175 = arith.mulf %174, %167 : vector<1x1x16xf32>
    %176 = vector.broadcast %2 : f32 to vector<1x1x16xf32>
    %177 = arith.addf %175, %176 : vector<1x1x16xf32>
    %178 = arith.mulf %177, %167 : vector<1x1x16xf32>
    %179 = vector.broadcast %1 : f32 to vector<1x1x16xf32>
    %180 = arith.addf %178, %179 : vector<1x1x16xf32>
    %181 = arith.mulf %180, %167 : vector<1x1x16xf32>
    %182 = vector.broadcast %6 : f32 to vector<1x1x16xf32>
    %183 = arith.addf %181, %182 : vector<1x1x16xf32>
    %184 = arith.negf %183 : vector<1x1x16xf32>
    %185 = math.exp %184 : vector<1x1x16xf32>
    %cst_17 = arith.constant 1.000000e+00 : f32
    %186 = vector.broadcast %cst_17 : f32 to vector<1x1x16xf32>
    %187 = arith.addf %186, %185 : vector<1x1x16xf32>
    %188 = arith.divf %186, %187 : vector<1x1x16xf32>
    %cst_18 = arith.constant 2.000000e+00 : f32
    %189 = vector.broadcast %cst_18 : f32 to vector<1x1x16xf32>
    %190 = arith.mulf %189, %188 : vector<1x1x16xf32>
    %191 = vector.broadcast %5 : f32 to vector<1x1x16xf32>
    %192 = arith.mulf %191, %190 : vector<1x1x16xf32>
    %193 = vector.broadcast %4 : f32 to vector<1x1x16xf32>
    %194 = arith.addf %192, %193 : vector<1x1x16xf32>
    %195 = arith.mulf %194, %190 : vector<1x1x16xf32>
    %196 = vector.broadcast %3 : f32 to vector<1x1x16xf32>
    %197 = arith.addf %195, %196 : vector<1x1x16xf32>
    %198 = arith.mulf %197, %190 : vector<1x1x16xf32>
    %199 = vector.broadcast %2 : f32 to vector<1x1x16xf32>
    %200 = arith.addf %198, %199 : vector<1x1x16xf32>
    %201 = arith.mulf %200, %190 : vector<1x1x16xf32>
    %202 = vector.broadcast %1 : f32 to vector<1x1x16xf32>
    %203 = arith.addf %201, %202 : vector<1x1x16xf32>
    %204 = arith.mulf %203, %190 : vector<1x1x16xf32>
    %205 = vector.broadcast %6 : f32 to vector<1x1x16xf32>
    %206 = arith.addf %204, %205 : vector<1x1x16xf32>
    %207 = arith.negf %206 : vector<1x1x16xf32>
    %208 = math.exp %207 : vector<1x1x16xf32>
    %cst_19 = arith.constant 1.000000e+00 : f32
    %209 = vector.broadcast %cst_19 : f32 to vector<1x1x16xf32>
    %210 = arith.addf %209, %208 : vector<1x1x16xf32>
    %211 = arith.divf %209, %210 : vector<1x1x16xf32>
    %cst_20 = arith.constant 2.000000e+00 : f32
    %212 = vector.broadcast %cst_20 : f32 to vector<1x1x16xf32>
    %213 = arith.mulf %212, %211 : vector<1x1x16xf32>
    %214 = vector.broadcast %5 : f32 to vector<1x1x16xf32>
    %215 = arith.mulf %214, %213 : vector<1x1x16xf32>
    %216 = vector.broadcast %4 : f32 to vector<1x1x16xf32>
    %217 = arith.addf %215, %216 : vector<1x1x16xf32>
    %218 = arith.mulf %217, %213 : vector<1x1x16xf32>
    %219 = vector.broadcast %3 : f32 to vector<1x1x16xf32>
    %220 = arith.addf %218, %219 : vector<1x1x16xf32>
    %221 = arith.mulf %220, %213 : vector<1x1x16xf32>
    %222 = vector.broadcast %2 : f32 to vector<1x1x16xf32>
    %223 = arith.addf %221, %222 : vector<1x1x16xf32>
    %224 = arith.mulf %223, %213 : vector<1x1x16xf32>
    %225 = vector.broadcast %1 : f32 to vector<1x1x16xf32>
    %226 = arith.addf %224, %225 : vector<1x1x16xf32>
    %227 = arith.mulf %226, %213 : vector<1x1x16xf32>
    %228 = vector.broadcast %6 : f32 to vector<1x1x16xf32>
    %229 = arith.addf %227, %228 : vector<1x1x16xf32>
    %230 = arith.negf %229 : vector<1x1x16xf32>
    %231 = math.exp %230 : vector<1x1x16xf32>
    %cst_21 = arith.constant 1.000000e+00 : f32
    %232 = vector.broadcast %cst_21 : f32 to vector<1x1x16xf32>
    %233 = arith.addf %232, %231 : vector<1x1x16xf32>
    %234 = arith.divf %232, %233 : vector<1x1x16xf32>
    %cst_22 = arith.constant 2.000000e+00 : f32
    %235 = vector.broadcast %cst_22 : f32 to vector<1x1x16xf32>
    %236 = arith.mulf %235, %234 : vector<1x1x16xf32>
    %c0_23 = arith.constant 0 : index
    %c0_24 = arith.constant 0 : index
    %c0_25 = arith.constant 0 : index
    %237 = vector.load %arg6[%c0_23, %c0_24, %c0_25] : memref<1x1x16xf32, #tpu.memory_space<vmem>>, vector<1x1x16xf32>
    tpu.vector_store %arg6[%c0_23, %c0_24, %c0_25], %236 {strides = array<i32>} : memref<1x1x16xf32, #tpu.memory_space<vmem>>, vector<1x1x16xf32>,
    %c0_26 = arith.constant 0 : index
    %c0_27 = arith.constant 0 : index
    %c0_28 = arith.constant 0 : index
    %238 = vector.load %arg4[%c0_26, %c0_27, %c0_28] : memref<1x8x16xf32, #tpu.memory_space<vmem>>, vector<1x8x16xf32>
    %239 = vector.broadcast %236 : vector<1x1x16xf32> to vector<1x8x16xf32>
    %240 = arith.mulf %238, %239 : vector<1x8x16xf32>
    %cst_29 = arith.constant dense<0.000000e+00> : vector<1x8x8xf32>
    %241 = tpu.matmul %240, %238, %cst_29 {dimension_numbers = #tpu.dot_dimension_numbers<[2], [2], [1], [1], [0, 0, 0, 1, 1, 1], [0], [0]>} : vector<1x8x16xf32>, vector<1x8x16xf32>, vector<1x8x8xf32> -> vector<1x8x8xf32>
    %c0_30 = arith.constant 0 : index
    %c0_31 = arith.constant 0 : index
    %c0_32 = arith.constant 0 : index
    %242 = vector.load %arg5[%c0_30, %c0_31, %c0_32] : memref<1x8x8xf32, #tpu.memory_space<vmem>>, vector<1x8x8xf32>
    tpu.vector_store %arg5[%c0_30, %c0_31, %c0_32], %241 {strides = array<i32>} : memref<1x8x8xf32, #tpu.memory_space<vmem>>, vector<1x8x8xf32>,
    return
  }
  func.func @transform_0(%arg0: i32) -> i32 {
    %c0_i32 = arith.constant 0 : i32
    %c0_i32_0 = arith.constant 0 : i32
    return %c0_i32 : i32
  }
  func.func @transform_1(%arg0: i32) -> i32 {
    %c0_i32 = arith.constant 0 : i32
    %c0_i32_0 = arith.constant 0 : i32
    return %c0_i32 : i32
  }
  func.func @transform_2(%arg0: i32) -> (i32, i32, i32) {
    %c0_i32 = arith.constant 0 : i32
    %c0_i32_0 = arith.constant 0 : i32
    %c0_i32_1 = arith.constant 0 : i32
    return %arg0, %c0_i32, %c0_i32_0 : i32, i32, i32
  }
  func.func @transform_3(%arg0: i32) -> (i32, i32, i32) {
    %c0_i32 = arith.constant 0 : i32
    %c0_i32_0 = arith.constant 0 : i32
    %c0_i32_1 = arith.constant 0 : i32
    return %arg0, %c0_i32, %c0_i32_0 : i32, i32, i32
  }
  func.func @transform_4(%arg0: i32) -> (i32, i32, i32) {
    %c0_i32 = arith.constant 0 : i32
    %c0_i32_0 = arith.constant 0 : i32
    %c0_i32_1 = arith.constant 0 : i32
    return %arg0, %c0_i32, %c0_i32_0 : i32, i32, i32
  }
  func.func @transform_5(%arg0: i32) -> (i32, i32, i32) {
    %c0_i32 = arith.constant 0 : i32
    %c0_i32_0 = arith.constant 0 : i32
    %c0_i32_1 = arith.constant 0 : i32
    return %arg0, %c0_i32, %c0_i32_0 : i32, i32, i32
  }
}

</mosaic_0001>

<llo_original>
// kernel: tpu_custom_call.1
$region0: #{tpu_custom_call.1}
  #allocation0 [shape = 'u32[]', space=smem, size = 0x4, offset = 0x4, fixed_abs, tag = 'smem constant byte address 0x4 - core index']
  #allocation1 [shape = 'u32[144,128]{1,0:T(1,128)}', space=vmem, size = 0x12000, scoped, tag = 'internal scratch']
  #allocation2 [shape = 'f32[1]{0:T(128)S(6)}', space=smem, size = 0x200, scoped, tag = 'scoped memory for tpu_custom_call.1']
  %s0 = inlined_call_operand.vmem [shape: f32[5], index: 0, kind: input, shape index: {}]
  %s1 = inlined_call_operand.<no memory space> [shape: f32[1], index: 1, kind: input, shape index: {}]
  %s2 = inlined_call_operand.vmem [shape: f32[2,1,16], index: 2, kind: input, shape index: {}]
  %s3 = inlined_call_operand.hbm [shape: f32[2,8,16], index: 3, kind: input, shape index: {}]
  %s4 = inlined_call_operand.hbm [shape: f32[2,8,8], index: 4, kind: output, shape index: {0}]
  %s5 = inlined_call_operand.hbm [shape: f32[2,1,16], index: 5, kind: output, shape index: {1}]
  %6 = xla_tuple %s4, %s5
  %s7 = sld [smem:[#allocation0]]
  $region65: #{tpu_custom_call.1} parent=0
    _
  %s9 = ssub.s32 1, %s7
  %s10 = scalar_select 0, %s9, %s7
  %11 = sst [smem:[#allocation2]] %s1
  $region1: #{tpu_custom_call.1} parent=0
    #allocation3 [shape = 'u8[512]{0}', space=smem, size = 0x200, scoped, tag = 'input window, operand 0, single buffered']
    #allocation4 [shape = 's32[2]{0}', space=sflag, size = 0x8, scoped, tag = 'scoped memory for tpu_custom_call.1']
    #allocation5 [shape = 's32[2]{0}', space=sflag, size = 0x8, scoped, tag = 'scoped memory for tpu_custom_call.1']
    #allocation6 [shape = 's32[2]{0}', space=sflag, size = 0x8, scoped, tag = 'scoped memory for tpu_custom_call.1']
    #allocation7 [shape = 'u8[8192]{0}', space=vmem, size = 0x2000, scoped, tag = 'input window, operand 3']
    #allocation8 [shape = 'u8[8192]{0}', space=vmem, size = 0x2000, scoped, tag = 'output window, operand 0']
    #allocation9 [shape = 'u8[1024]{0}', space=vmem, size = 0x400, scoped, tag = 'output window, operand 1']
    #allocation10 [shape = 's32[2]{0}', space=sflag, size = 0x8, scoped, tag = 'scoped memory for tpu_custom_call.1']
    %12 = vsyncpa [#allocation6], 0
    %13 = vsyncpa [#allocation4], 0
    %s14 = scalar_lea.sflag [#allocation4], 1
    %15 = vsyncpa %s14, 0
    %16 = vsyncpa [#allocation5], 0
    %s17 = scalar_lea.sflag [#allocation5], 1
    %18 = vsyncpa %s17, 0
    %19 = vsyncpa [#allocation10], 0
    %s20 = scalar_lea.sflag [#allocation10], 1
    %21 = vsyncpa %s20, 0
    loop: start=0, step=1, limit=4
    $region2: #{tpu_custom_call.1} parent=1 // loop_pre_header
      _
    $region3: #{tpu_custom_call.1} parent=1 // loop_header
      %s23 = sphi 0, %s27
      %p24 = scmp.ge.s32.totalorder %s23, 4
      %s31 = sphi 0, %s31
      %s33 = sphi 0, %s31
      %s34 = sphi 0, %s33
      %s48 = sphi 0, %s34
      %s52 = sphi 0, %s52
      %s54 = sphi 0, %s52
      %s55 = sphi 0, %s54
      %s69 = sphi 0, %s55
      %s75 = sphi 0, %s77
      %s78 = sphi 0, %s75
      %s79 = sphi 0, %s78
      %s95 = sphi 0, %s79
      %s101 = sphi 0, %s103
      %s104 = sphi 0, %s101
      %s105 = sphi 0, %s104
      %s121 = sphi 0, %s105
      %s127 = sphi 0, %s129
      %s130 = sphi 0, %s127
      %s131 = sphi 0, %s130
      %s147 = sphi 0, %s131
      %s153 = sphi 0, %s155
      %s156 = sphi 0, %s153
      %s157 = sphi 0, %s156
      %s173 = sphi 0, %s157
    $region4: #{tpu_custom_call.1} parent=1 // loop_header_branch
      %26 = sbr.rel (%p24) target = $region8
    $region5: #{tpu_custom_call.1} parent=1 // loop_body
      %s28 = ssub.s32 %s23, 1
      %s29 = ssub.s32 %s23, 2
      %s30 = sadd.s32 %s23, 1
      %s32 = sadd.s32 %s31, 1
      %p35 = scmp.eq.s32.totalorder %s23, 1
      %p36 = scmp.ne.s32.totalorder %s31, %s33
      %p37 = scmp.eq.s32.totalorder %s23, 0
      %p38 = por %p36, %p37
      %p39 = scmp.ne.s32.totalorder %s31, %s33
      %p40 = scmp.eq.s32.totalorder %s28, 1
      %p41 = por %p39, %p40
      %p42 = scmp.ne.s32.totalorder %s33, %s34
      %p43 = scmp.eq.s32.totalorder %s28, 0
      %p44 = por %p42, %p43
      %p45 = scmp.ne.s32.totalorder %s33, %s34
      %p46 = scmp.eq.s32.totalorder %s29, 1
      %p47 = por %p45, %p46
      %p49 = scmp.ne.s32.totalorder %s34, %s48
      %p50 = scmp.eq.s32.totalorder %s29, 0
      %p51 = por %p49, %p50
      %s53 = sadd.s32 %s52, 1
      %p56 = scmp.eq.s32.totalorder %s23, 1
      %p57 = scmp.ne.s32.totalorder %s52, %s54
      %p58 = scmp.eq.s32.totalorder %s23, 0
      %p59 = por %p57, %p58
      %p60 = scmp.ne.s32.totalorder %s52, %s54
      %p61 = scmp.eq.s32.totalorder %s28, 1
      %p62 = por %p60, %p61
      %p63 = scmp.ne.s32.totalorder %s54, %s55
      %p64 = scmp.eq.s32.totalorder %s28, 0
      %p65 = por %p63, %p64
      %p66 = scmp.ne.s32.totalorder %s54, %s55
      %p67 = scmp.eq.s32.totalorder %s29, 1
      %p68 = por %p66, %p67
      %p70 = scmp.ne.s32.totalorder %s55, %s69
      %p71 = scmp.eq.s32.totalorder %s29, 0
      %p72 = por %p70, %p71
      %s73 = ssub.s32 %s23, %s30
      %p74 = scmp.eq.s32.totalorder %s73, 0
      %s76 = sadd.s32 %s75, 1
      %s77 = scalar_select %p74, %s75, %s76
      %p80 = pneg %p74
      %p81 = scmp.eq.s32.totalorder %s23, 1
      %p82 = por %p80, %p81
      %p83 = scmp.ne.s32.totalorder %s75, %s78
      %p84 = scmp.eq.s32.totalorder %s23, 0
      %p85 = por %p83, %p84
      %p86 = scmp.ne.s32.totalorder %s75, %s78
      %p87 = scmp.eq.s32.totalorder %s28, 1
      %p88 = por %p86, %p87
      %p89 = scmp.ne.s32.totalorder %s78, %s79
      %p90 = scmp.eq.s32.totalorder %s28, 0
      %p91 = por %p89, %p90
      %p92 = scmp.ne.s32.totalorder %s78, %s79
      %p93 = scmp.eq.s32.totalorder %s29, 1
      %p94 = por %p92, %p93
      %p96 = scmp.ne.s32.totalorder %s79, %s95
      %p97 = scmp.eq.s32.totalorder %s29, 0
      %p98 = por %p96, %p97
      %s99 = ssub.s32 %s23, %s30
      %p100 = scmp.eq.s32.totalorder %s99, 0
      %s102 = sadd.s32 %s101, 1
      %s103 = scalar_select %p100, %s101, %s102
      %p106 = pneg %p100
      %p107 = scmp.eq.s32.totalorder %s23, 1
      %p108 = por %p106, %p107
      %p109 = scmp.ne.s32.totalorder %s101, %s104
      %p110 = scmp.eq.s32.totalorder %s23, 0
      %p111 = por %p109, %p110
      %p112 = scmp.ne.s32.totalorder %s101, %s104
      %p113 = scmp.eq.s32.totalorder %s28, 1
      %p114 = por %p112, %p113
      %p115 = scmp.ne.s32.totalorder %s104, %s105
      %p116 = scmp.eq.s32.totalorder %s28, 0
      %p117 = por %p115, %p116
      %p118 = scmp.ne.s32.totalorder %s104, %s105
      %p119 = scmp.eq.s32.totalorder %s29, 1
      %p120 = por %p118, %p119
      %p122 = scmp.ne.s32.totalorder %s105, %s121
      %p123 = scmp.eq.s32.totalorder %s29, 0
      %p124 = por %p122, %p123
      %s125 = ssub.s32 %s23, %s30
      %p126 = scmp.eq.s32.totalorder %s125, 0
      %s128 = sadd.s32 %s127, 1
      %s129 = scalar_select %p126, %s127, %s128
      %p132 = pneg %p126
      %p133 = scmp.eq.s32.totalorder %s23, 1
      %p134 = por %p132, %p133
      %p135 = scmp.ne.s32.totalorder %s127, %s130
      %p136 = scmp.eq.s32.totalorder %s23, 0
      %p137 = por %p135, %p136
      %p138 = scmp.ne.s32.totalorder %s127, %s130
      %p139 = scmp.eq.s32.totalorder %s28, 1
      %p140 = por %p138, %p139
      %p141 = scmp.ne.s32.totalorder %s130, %s131
      %p142 = scmp.eq.s32.totalorder %s28, 0
      %p143 = por %p141, %p142
      %p144 = scmp.ne.s32.totalorder %s130, %s131
      %p145 = scmp.eq.s32.totalorder %s29, 1
      %p146 = por %p144, %p145
      %p148 = scmp.ne.s32.totalorder %s131, %s147
      %p149 = scmp.eq.s32.totalorder %s29, 0
      %p150 = por %p148, %p149
      %s151 = ssub.s32 %s23, %s30
      %p152 = scmp.eq.s32.totalorder %s151, 0
      %s154 = sadd.s32 %s153, 1
      %s155 = scalar_select %p152, %s153, %s154
      %p158 = pneg %p152
      %p159 = scmp.eq.s32.totalorder %s23, 1
      %p160 = por %p158, %p159
      %p161 = scmp.ne.s32.totalorder %s153, %s156
      %p162 = scmp.eq.s32.totalorder %s23, 0
      %p163 = por %p161, %p162
      %p164 = scmp.ne.s32.totalorder %s153, %s156
      %p165 = scmp.eq.s32.totalorder %s28, 1
      %p166 = por %p164, %p165
      %p167 = scmp.ne.s32.totalorder %s156, %s157
      %p168 = scmp.eq.s32.totalorder %s28, 0
      %p169 = por %p167, %p168
      %p170 = scmp.ne.s32.totalorder %s156, %s157
      %p171 = scmp.eq.s32.totalorder %s29, 1
      %p172 = por %p170, %p171
      %p174 = scmp.ne.s32.totalorder %s157, %s173
      %p175 = scmp.eq.s32.totalorder %s29, 0
      %p176 = por %p174, %p175
      %p177 = scmp.le.s32.totalorder 1, %s23
      %p178 = scmp.lt.s32.totalorder %s23, 3
      %p179 = pnand %p177, %p178
      %p180 = pneg %p179
      // Predicated region
      $region9: #{tpu_custom_call.1} parent=5 // pred_check
        _
      $region10: #{tpu_custom_call.1} parent=5 // pred_check_branch
        %182 = sbr.rel (%p179) target = $region12
      $region11: #{tpu_custom_call.1} parent=5 // pred_region
        %s183 = ssub.s32 %s23, 1
        // Predicated region
        $region13: #{tpu_custom_call.1} parent=11 // pred_check
          %p184 = pneg %p44
        $region14: #{tpu_custom_call.1} parent=11 // pred_check_branch
          %186 = sbr.rel (%p184) target = $region16
        $region15: #{tpu_custom_call.1} parent=11 // pred_region
          %s188 = ssub.s32 16, 16
          %189 = vsyncadd [#allocation6], %s188
          %s191 = sshll.u32 %s0, 4
          %s192 = int_to_ptr.vmem [resolvable:$true] %s191
          %194 = dma.vmem_to_smem %s192, 16, [#allocation3], [#allocation6]
        $region16: #{tpu_custom_call.1} parent=11 // pred_fallthru
          _
        // Predicated region
        $region17: #{tpu_custom_call.1} parent=11 // pred_check
          %p195 = pneg %p65
        $region18: #{tpu_custom_call.1} parent=11 // pred_check_branch
          %197 = sbr.rel (%p195) target = $region20
        $region19: #{tpu_custom_call.1} parent=11 // pred_region
          _
        $region20: #{tpu_custom_call.1} parent=11 // pred_fallthru
          _
      $region12: #{tpu_custom_call.1} parent=5 // pred_fallthru
        _
      %p198 = scmp.lt.s32.totalorder %s23, 2
      // Predicated region
      $region21: #{tpu_custom_call.1} parent=5 // pred_check
        %p199 = pneg %p198
      $region22: #{tpu_custom_call.1} parent=5 // pred_check_branch
        %201 = sbr.rel (%p199) target = $region24
      $region23: #{tpu_custom_call.1} parent=5 // pred_region
        // Predicated region
        $region25: #{tpu_custom_call.1} parent=23 // pred_check
          %p202 = pneg %p85
        $region26: #{tpu_custom_call.1} parent=23 // pred_check_branch
          %204 = sbr.rel (%p202) target = $region28
        $region27: #{tpu_custom_call.1} parent=23 // pred_region
          %p205 = scmp.lt.s32.totalorder %s23, 1
          %s206 = scalar_select %p205, %s23, 1
          %s207 = scalar_lea.vmem %s2, %s206
        $region28: #{tpu_custom_call.1} parent=23 // pred_fallthru
          _
        // Predicated region
        $region29: #{tpu_custom_call.1} parent=23 // pred_check
          %p208 = pneg %p111
        $region30: #{tpu_custom_call.1} parent=23 // pred_check_branch
          %210 = sbr.rel (%p208) target = $region32
        $region31: #{tpu_custom_call.1} parent=23 // pred_region
          %s211 = sand.u32 %s101, 1
          %s212 = scalar_lea.sflag [#allocation4], %s211
          %s213 = sand.u32 %s101, 1
          %s214 = smul.addr %s213, 8
          %s215 = scalar_lea.vmem [#allocation7], %s214
          %s217 = ssub.s32 128, 128
          %218 = vsyncadd %s212, %s217
          %s219 = smul.addr %s23, 128
          %s220 = scalar_lea.hbm %s3, %s219
          %s222 = sshll.u32 %s215, 4
          %s223 = int_to_ptr.vmem [resolvable:$true] %s222
          %225 = dma.hbm_to_vmem [thread:$0]  %s220, 128, %s223, %s212
        $region32: #{tpu_custom_call.1} parent=23 // pred_fallthru
          _
      $region24: #{tpu_custom_call.1} parent=5 // pred_fallthru
        _
      %p226 = scmp.le.s32.totalorder 1, %s23
      %p227 = scmp.lt.s32.totalorder %s23, 3
      %p228 = pnand %p226, %p227
      %p229 = pneg %p228
      // Predicated region
      $region33: #{tpu_custom_call.1} parent=5 // pred_check
        _
      $region34: #{tpu_custom_call.1} parent=5 // pred_check_branch
        %231 = sbr.rel (%p228) target = $region36
      $region35: #{tpu_custom_call.1} parent=5 // pred_region
        %s232 = ssub.s32 %s23, 1
        // Predicated region
        $region37: #{tpu_custom_call.1} parent=35 // pred_check
          %p233 = pneg %p44
        $region38: #{tpu_custom_call.1} parent=35 // pred_check_branch
          %235 = sbr.rel (%p233) target = $region40
        $region39: #{tpu_custom_call.1} parent=35 // pred_region
          %236 = dma.done [#allocation6], 16
        $region40: #{tpu_custom_call.1} parent=35 // pred_fallthru
          _
        %s237 = sand.u32 %s104, 1
        %s238 = scalar_lea.sflag [#allocation4], %s237
        %s239 = sand.u32 %s104, 1
        %s240 = smul.addr %s239, 8
        %s241 = scalar_lea.vmem [#allocation7], %s240
        // Predicated region
        $region41: #{tpu_custom_call.1} parent=35 // pred_check
          %p242 = pneg %p117
        $region42: #{tpu_custom_call.1} parent=35 // pred_check_branch
          %244 = sbr.rel (%p242) target = $region44
        $region43: #{tpu_custom_call.1} parent=35 // pred_region
          %245 = dma.done %s238, 128
        $region44: #{tpu_custom_call.1} parent=35 // pred_fallthru
          _
        %246 = sfence
        %p247 = pneg %p44
        %p248 = pneg %p41
        %p249 = pneg %p65
        %p250 = pneg %p62
        %p251 = scmp.lt.s32.totalorder %s28, 1
        %s252 = scalar_select %p251, %s28, 1
        %s253 = scalar_lea.vmem %s2, %s252
        %p254 = pneg %p91
        %p255 = pneg %p88
        %s256 = sand.u32 %s104, 1
        %s257 = scalar_lea.sflag [#allocation4], %s256
        %s258 = sand.u32 %s104, 1
        %s259 = smul.addr %s258, 8
        %s260 = scalar_lea.vmem [#allocation7], %s259
        %p261 = pneg %p117
        %p262 = pneg %p114
        %p263 = pneg %p143
        %p264 = pneg %p140
        %s265 = sand.u32 %s130, 1
        %s266 = scalar_lea.sflag [#allocation5], %s265
        %s267 = sand.u32 %s130, 1
        %s268 = smul.addr %s267, 8
        %s269 = scalar_lea.vmem [#allocation8], %s268
        %p270 = pneg %p169
        %p271 = pneg %p166
        %s272 = sand.u32 %s156, 1
        %s273 = scalar_lea.sflag [#allocation10], %s272
        %s274 = sand.u32 %s156, 1
        %s275 = scalar_lea.vmem [#allocation9], %s274
        %p276 = scmp.lt.s32.totalorder %s28, 1
        %s277 = scalar_select %p276, %s28, 1
        %s278 = scalar_lea.vmem %s2, %s277
        %v279 = vld [vmem:[%s278] sm:$0x1]
        %s280 = sld [smem:[#allocation3]]
        %s281 = sld [smem:[#allocation3 + $0x1]]
        %s282 = sld [smem:[#allocation3 + $0x2]]
        %s283 = sld [smem:[#allocation3 + $0x3]]
        %s284 = sld [smem:[#allocation3 + $0x4]]
        %s285 = sld [smem:[#allocation2]]
        %v286 = vstv %s284
        %v287 = vmul.f32 %v286, %v279
        %v288 = vstv %s283
        %v289 = vadd.f32 %v287, %v288
        %v290 = vmul.f32 %v289, %v279
        %v291 = vstv %s282
        %v292 = vadd.f32 %v290, %v291
        %v293 = vmul.f32 %v292, %v279
        %v294 = vstv %s281
        %v295 = vadd.f32 %v293, %v294
        %v296 = vmul.f32 %v295, %v279
        %v297 = vstv %s280
        %v298 = vadd.f32 %v296, %v297
        %v299 = vmul.f32 %v298, %v279
        %v300 = vstv %s285
        %v301 = vadd.f32 %v299, %v300
        %v302 = vxor.u32 %v301, 2147483648
        %v303 = vmul.f32 %v302, 1.442695
        %v304 = vpow.pop %v303
        %v305 = vadd.f32 %v304, 1.0
        %v306 = vrcp.pop %v305
        %v307 = vmul.f32 1.0, %v306
        %v308 = vmul.f32 %v307, 2.0
        %v309 = vmul.f32 %v286, %v308
        %v310 = vadd.f32 %v309, %v288
        %v311 = vmul.f32 %v310, %v308
        %v312 = vadd.f32 %v311, %v291
        %v313 = vmul.f32 %v312, %v308
        %v314 = vadd.f32 %v313, %v294
        %v315 = vmul.f32 %v314, %v308
        %v316 = vadd.f32 %v315, %v297
        %v317 = vmul.f32 %v316, %v308
        %v318 = vadd.f32 %v317, %v300
        %v319 = vxor.u32 %v318, 2147483648
        %v320 = vmul.f32 %v319, 1.442695
        %v321 = vpow.pop %v320
        %v322 = vadd.f32 %v321, 1.0
        %v323 = vrcp.pop %v322
        %v324 = vmul.f32 1.0, %v323
        %v325 = vmul.f32 %v324, 2.0
        %v326 = vmul.f32 %v286, %v325
        %v327 = vadd.f32 %v326, %v288
        %v328 = vmul.f32 %v327, %v325
        %v329 = vadd.f32 %v328, %v291
        %v330 = vmul.f32 %v329, %v325
        %v331 = vadd.f32 %v330, %v294
        %v332 = vmul.f32 %v331, %v325
        %v333 = vadd.f32 %v332, %v297
        %v334 = vmul.f32 %v333, %v325
        %v335 = vadd.f32 %v334, %v300
        %v336 = vxor.u32 %v335, 2147483648
        %v337 = vmul.f32 %v336, 1.442695
        %v338 = vpow.pop %v337
        %v339 = vadd.f32 %v338, 1.0
        %v340 = vrcp.pop %v339
        %v341 = vmul.f32 1.0, %v340
        %v342 = vmul.f32 %v341, 2.0
        %v343 = vmul.f32 %v286, %v342
        %v344 = vadd.f32 %v343, %v288
        %v345 = vmul.f32 %v344, %v342
        %v346 = vadd.f32 %v345, %v291
        %v347 = vmul.f32 %v346, %v342
        %v348 = vadd.f32 %v347, %v294
        %v349 = vmul.f32 %v348, %v342
        %v350 = vadd.f32 %v349, %v297
        %v351 = vmul.f32 %v350, %v342
        %v352 = vadd.f32 %v351, %v300
        %v353 = vxor.u32 %v352, 2147483648
        %v354 = vmul.f32 %v353, 1.442695
        %v355 = vpow.pop %v354
        %v356 = vadd.f32 %v355, 1.0
        %v357 = vrcp.pop %v356
        %v358 = vmul.f32 1.0, %v357
        %v359 = vmul.f32 %v358, 2.0
        %v360 = vmul.f32 %v286, %v359
        %v361 = vadd.f32 %v360, %v288
        %v362 = vmul.f32 %v361, %v359
        %v363 = vadd.f32 %v362, %v291
        %v364 = vmul.f32 %v363, %v359
        %v365 = vadd.f32 %v364, %v294
        %v366 = vmul.f32 %v365, %v359
        %v367 = vadd.f32 %v366, %v297
        %v368 = vmul.f32 %v367, %v359
        %v369 = vadd.f32 %v368, %v300
        %v370 = vxor.u32 %v369, 2147483648
        %v371 = vmul.f32 %v370, 1.442695
        %v372 = vpow.pop %v371
        %v373 = vadd.f32 %v372, 1.0
        %v374 = vrcp.pop %v373
        %v375 = vmul.f32 1.0, %v374
        %v376 = vmul.f32 %v375, 2.0
        %v377 = vmul.f32 %v286, %v376
        %v378 = vadd.f32 %v377, %v288
        %v379 = vmul.f32 %v378, %v376
        %v380 = vadd.f32 %v379, %v291
        %v381 = vmul.f32 %v380, %v376
        %v382 = vadd.f32 %v381, %v294
        %v383 = vmul.f32 %v382, %v376
        %v384 = vadd.f32 %v383, %v297
        %v385 = vmul.f32 %v384, %v376
        %v386 = vadd.f32 %v385, %v300
        %v387 = vxor.u32 %v386, 2147483648
        %v388 = vmul.f32 %v387, 1.442695
        %v389 = vpow.pop %v388
        %v390 = vadd.f32 %v389, 1.0
        %v391 = vrcp.pop %v390
        %v392 = vmul.f32 1.0, %v391
        %v393 = vmul.f32 %v392, 2.0
        %v394 = vmul.f32 %v286, %v393
        %v395 = vadd.f32 %v394, %v288
        %v396 = vmul.f32 %v395, %v393
        %v397 = vadd.f32 %v396, %v291
        %v398 = vmul.f32 %v397, %v393
        %v399 = vadd.f32 %v398, %v294
        %v400 = vmul.f32 %v399, %v393
        %v401 = vadd.f32 %v400, %v297
        %v402 = vmul.f32 %v401, %v393
        %v403 = vadd.f32 %v402, %v300
        %v404 = vxor.u32 %v403, 2147483648
        %v405 = vmul.f32 %v404, 1.442695
        %v406 = vpow.pop %v405
        %v407 = vadd.f32 %v406, 1.0
        %v408 = vrcp.pop %v407
        %v409 = vmul.f32 1.0, %v408
        %v410 = vmul.f32 %v409, 2.0
        %v411 = vmul.f32 %v286, %v410
        %v412 = vadd.f32 %v411, %v288
        %v413 = vmul.f32 %v412, %v410
        %v414 = vadd.f32 %v413, %v291
        %v415 = vmul.f32 %v414, %v410
        %v416 = vadd.f32 %v415, %v294
        %v417 = vmul.f32 %v416, %v410
        %v418 = vadd.f32 %v417, %v297
        %v419 = vmul.f32 %v418, %v410
        %v420 = vadd.f32 %v419, %v300
        %v421 = vxor.u32 %v420, 2147483648
        %v422 = vmul.f32 %v421, 1.442695
        %v423 = vpow.pop %v422
        %v424 = vadd.f32 %v423, 1.0
        %v425 = vrcp.pop %v424
        %v426 = vmul.f32 1.0, %v425
        %v427 = vmul.f32 %v426, 2.0
        %v428 = vmul.f32 %v286, %v427
        %v429 = vadd.f32 %v428, %v288
        %v430 = vmul.f32 %v429, %v427
        %v431 = vadd.f32 %v430, %v291
        %v432 = vmul.f32 %v431, %v427
        %v433 = vadd.f32 %v432, %v294
        %v434 = vmul.f32 %v433, %v427
        %v435 = vadd.f32 %v434, %v297
        %v436 = vmul.f32 %v435, %v427
        %v437 = vadd.f32 %v436, %v300
        %v438 = vxor.u32 %v437, 2147483648
        %v439 = vmul.f32 %v438, 1.442695
        %v440 = vpow.pop %v439
        %v441 = vadd.f32 %v440, 1.0
        %v442 = vrcp.pop %v441
        %v443 = vmul.f32 1.0, %v442
        %v444 = vmul.f32 %v443, 2.0
        %v445 = vmul.f32 %v286, %v444
        %v446 = vadd.f32 %v445, %v288
        %v447 = vmul.f32 %v446, %v444
        %v448 = vadd.f32 %v447, %v291
        %v449 = vmul.f32 %v448, %v444
        %v450 = vadd.f32 %v449, %v294
        %v451 = vmul.f32 %v450, %v444
        %v452 = vadd.f32 %v451, %v297
        %v453 = vmul.f32 %v452, %v444
        %v454 = vadd.f32 %v453, %v300
        %v455 = vxor.u32 %v454, 2147483648
        %v456 = vmul.f32 %v455, 1.442695
        %v457 = vpow.pop %v456
        %v458 = vadd.f32 %v457, 1.0
        %v459 = vrcp.pop %v458
        %v460 = vmul.f32 1.0, %v459
        %v461 = vmul.f32 %v460, 2.0
        %vm462 = vcmask 122880
        %463 = vst.msk [vmem:[%s275] sm:$0x1] %vm462, %v461
        %v464 = vld [vmem:[%s241] sm:$0xff]
        %v466 = vlaneseq
        %v467 = vshrl.u32 %v466, 7
        %v468 = vsub.s32 0, %v467
        %v469 = vrot.slane %v461, %v468
        %v471 = vmul.f32 %v464, %v469
        %vm472 = vcmask 130048
        %v474 = vsel %vm472, %v471, 0
        %v477 = vsel %vm472, %v464, 0
        %479 = vmatprep.subr.mxu0 0.0
        %480 = vmatpush1.xpose.msra.mxu0 %v477
        %481 = vmatprep.subr.mxu0 0.0
        %482 = vmatpush1.xpose.msra.mxu0 0.0
        %483 = vmatprep.subr.mxu0 0.0
        %484 = vmatpush1.xpose.msra.mxu0 0.0
        %485 = vmatprep.subr.mxu0 0.0
        %486 = vmatpush1.xpose.msra.mxu0 0.0
        %487 = vmatprep.subr.mxu0 0.0
        %488 = vmatpush1.xpose.msra.mxu0 0.0
        %489 = vmatprep.subr.mxu0 0.0
        %490 = vmatpush1.xpose.msra.mxu0 0.0
        %491 = vmatprep.subr.mxu0 0.0
        %492 = vmatpush1.xpose.msra.mxu0 0.0
        %493 = vmatprep.subr.mxu0 0.0
        %494 = vmatpush1.xpose.msra.mxu0 0.0
        %495 = vmatprep.subr.mxu0 0.0
        %496 = vmatpush1.xpose.msra.mxu0 0.0
        %497 = vmatprep.subr.mxu0 0.0
        %498 = vmatpush1.xpose.msra.mxu0 0.0
        %499 = vmatprep.subr.mxu0 0.0
        %500 = vmatpush1.xpose.msra.mxu0 0.0
        %501 = vmatprep.subr.mxu0 0.0
        %502 = vmatpush1.xpose.msra.mxu0 0.0
        %503 = vmatprep.subr.mxu0 0.0
        %504 = vmatpush1.xpose.msra.mxu0 0.0
        %505 = vmatprep.subr.mxu0 0.0
        %506 = vmatpush1.xpose.msra.mxu0 0.0
        %507 = vmatprep.subr.mxu0 0.0
        %508 = vmatpush1.xpose.msra.mxu0 0.0
        %509 = vmatprep.subr.mxu0 0.0
        %510 = vmatpush1.xpose.msra.mxu0 0.0
        %511 = vmatprep.subr.mxu0 0.0
        %512 = vmatpush1.xpose.msra.mxu0 0.0
        %513 = vmatprep.subr.mxu0 0.0
        %514 = vmatpush1.xpose.msra.mxu0 0.0
        %515 = vmatprep.subr.mxu0 0.0
        %516 = vmatpush1.xpose.msra.mxu0 0.0
        %517 = vmatprep.subr.mxu0 0.0
        %518 = vmatpush1.xpose.msra.mxu0 0.0
        %519 = vmatprep.subr.mxu0 0.0
        %520 = vmatpush1.xpose.msra.mxu0 0.0
        %521 = vmatprep.subr.mxu0 0.0
        %522 = vmatpush1.xpose.msra.mxu0 0.0
        %523 = vmatprep.subr.mxu0 0.0
        %524 = vmatpush1.xpose.msra.mxu0 0.0
        %525 = vmatprep.subr.mxu0 0.0
        %526 = vmatpush1.xpose.msra.mxu0 0.0
        %527 = vmatprep.subr.mxu0 0.0
        %528 = vmatpush1.xpose.msra.mxu0 0.0
        %529 = vmatprep.subr.mxu0 0.0
        %530 = vmatpush1.xpose.msra.mxu0 0.0
        %531 = vmatprep.subr.mxu0 0.0
        %532 = vmatpush1.xpose.msra.mxu0 0.0
        %533 = vmatprep.subr.mxu0 0.0
        %534 = vmatpush1.xpose.msra.mxu0 0.0
        %535 = vmatprep.subr.mxu0 0.0
        %536 = vmatpush1.xpose.msra.mxu0 0.0
        %537 = vmatprep.subr.mxu0 0.0
        %538 = vmatpush1.xpose.msra.mxu0 0.0
        %539 = vmatprep.subr.mxu0 0.0
        %540 = vmatpush1.xpose.msra.mxu0 0.0
        %541 = vmatprep.subr.mxu0 0.0
        %542 = vmatpush1.xpose.msra.mxu0 0.0
        %543 = vmatprep.mubr.f32.mxu0 0.0
        %544 = vmatmul.mubr.f32.gmra.mrb[0].mxu0 %v474
        %v545 = vpop.f32.mrb[0].mxu0
        %v546 = vadd.f32 0.0, %v545
        %v547 = vpop.f32.mrb[0].mxu0
        %548 = vdwg.mxu0
        %vm549 = vcmask 64512
        %550 = vst.msk [vmem:[%s269] sm:$0xff] %vm549, %v546
        %s551 = sand.u32 %s130, 1
        %s552 = scalar_lea.sflag [#allocation5], %s551
        %s553 = sand.u32 %s130, 1
        %s554 = smul.addr %s553, 8
        %s555 = scalar_lea.vmem [#allocation8], %s554
        %s556 = sand.u32 %s156, 1
        %s557 = scalar_lea.sflag [#allocation10], %s556
        %s558 = sand.u32 %s156, 1
        %s559 = scalar_lea.vmem [#allocation9], %s558
        // Predicated region
        $region45: #{tpu_custom_call.1} parent=35 // pred_check
          %p560 = pneg %p140
        $region46: #{tpu_custom_call.1} parent=35 // pred_check_branch
          %562 = sbr.rel (%p560) target = $region48
        $region47: #{tpu_custom_call.1} parent=35 // pred_region
          %s564 = ssub.s32 128, 128
          %565 = vsyncadd %s552, %s564
          %s566 = smul.addr %s28, 128
          %s567 = scalar_lea.hbm %s4, %s566
          %s569 = sshll.u32 %s555, 4
          %s570 = int_to_ptr.vmem [resolvable:$true] %s569
          %572 = dma.vmem_to_hbm [thread:$0]  %s570, 128, %s567, %s552
        $region48: #{tpu_custom_call.1} parent=35 // pred_fallthru
          _
        // Predicated region
        $region49: #{tpu_custom_call.1} parent=35 // pred_check
          %p573 = pneg %p166
        $region50: #{tpu_custom_call.1} parent=35 // pred_check_branch
          %575 = sbr.rel (%p573) target = $region52
        $region51: #{tpu_custom_call.1} parent=35 // pred_region
          %s577 = ssub.s32 16, 16
          %578 = vsyncadd %s557, %s577
          %s579 = smul.addr %s28, 16
          %s580 = scalar_lea.hbm %s5, %s579
          %s582 = sshll.u32 %s559, 4
          %s583 = int_to_ptr.vmem [resolvable:$true] %s582
          %585 = dma.vmem_to_hbm [thread:$0]  %s583, 16, %s580, %s557
        $region52: #{tpu_custom_call.1} parent=35 // pred_fallthru
          _
      $region36: #{tpu_custom_call.1} parent=5 // pred_fallthru
        _
      %p586 = scmp.le.s32.totalorder 2, %s23
      // Predicated region
      $region53: #{tpu_custom_call.1} parent=5 // pred_check
        %p587 = pneg %p586
      $region54: #{tpu_custom_call.1} parent=5 // pred_check_branch
        %589 = sbr.rel (%p587) target = $region56
      $region55: #{tpu_custom_call.1} parent=5 // pred_region
        %s590 = ssub.s32 %s23, 2
        // Predicated region
        $region57: #{tpu_custom_call.1} parent=55 // pred_check
          %p591 = pneg %p146
        $region58: #{tpu_custom_call.1} parent=55 // pred_check_branch
          %593 = sbr.rel (%p591) target = $region60
        $region59: #{tpu_custom_call.1} parent=55 // pred_region
          %s594 = sand.u32 %s131, 1
          %s595 = scalar_lea.sflag [#allocation5], %s594
          %s596 = sand.u32 %s131, 1
          %s597 = smul.addr %s596, 8
          %s598 = scalar_lea.vmem [#allocation8], %s597
          %599 = dma.done %s595, 128
        $region60: #{tpu_custom_call.1} parent=55 // pred_fallthru
          _
        // Predicated region
        $region61: #{tpu_custom_call.1} parent=55 // pred_check
          %p600 = pneg %p172
        $region62: #{tpu_custom_call.1} parent=55 // pred_check_branch
          %602 = sbr.rel (%p600) target = $region64
        $region63: #{tpu_custom_call.1} parent=55 // pred_region
          %s603 = sand.u32 %s157, 1
          %s604 = scalar_lea.sflag [#allocation10], %s603
          %s605 = sand.u32 %s157, 1
          %s606 = scalar_lea.vmem [#allocation9], %s605
          %607 = dma.done %s604, 16
        $region64: #{tpu_custom_call.1} parent=55 // pred_fallthru
          _
      $region56: #{tpu_custom_call.1} parent=5 // pred_fallthru
        _
    $region6: #{tpu_custom_call.1} parent=1 // loop_footer
      %s27 = sadd.s32 1, %s23
    $region7: #{tpu_custom_call.1} parent=1 // loop_footer_branch
      %22 = sbr.rel target = $region3
    $region8: #{tpu_custom_call.1} parent=1 // loop_exit
      _
    %608 = vsyncpa [#allocation4], 1
    %s609 = scalar_lea.sflag [#allocation4], 1
    %610 = vsyncpa %s609, 1
    %611 = vsyncpa [#allocation5], 1
    %s612 = scalar_lea.sflag [#allocation5], 1
    %613 = vsyncpa %s612, 1
    %614 = vsyncpa [#allocation10], 1
    %s615 = scalar_lea.sflag [#allocation10], 1
    %616 = vsyncpa %s615, 1
    %617 = vsyncpa [#allocation6], 1
    %s618 = scalar_lea.sflag [#allocation6], 1
    %619 = vsyncpa %s618, 1

</llo_original>
